<compile_context>
chip_gen: v5e
topology: v5e:2x2
jax: 0.10.0
libtpu: 0.0.40
codegen_flags: <defaults>
</compile_context>

<pallas_src>
import functools

import jax
import jax.numpy as jnp
from jax import lax
from jax.experimental import pallas as pl
from jax.experimental.pallas import tpu as pltpu


def gtsconv_kernel(x_ref, w_ref, gamma_ref, beta_ref, o_ref, sh_ref,
                   *, n_groups, t_len, eps):
    c, nt = x_ref.shape
    g = n_groups

    # ---- temporal shift: only the 2G permuted shift channels ----------------
    # lane index within each sample's time window (j = n*T + t  ->  j % T)
    t_in_sample = lax.broadcasted_iota(jnp.int32, (1, nt), 1) % t_len
    xl = x_ref[0:g, :]            # shift-left channels   (G, N*T)
    xr = x_ref[g:2 * g, :]        # shift-right channels  (G, N*T)
    # rolls run on the XLU slot; cross-sample wraparound lanes are zeroed below,
    # which is exactly the zero padding InplaceShift requires.
    xl_s = jnp.where(t_in_sample == t_len - 1, 0.0,
                     pltpu.roll(xl, nt - 1, axis=1))      # out[t] = in[t+1]
    xr_s = jnp.where(t_in_sample == 0, 0.0,
                     pltpu.roll(xr, 1, axis=1))           # out[t] = in[t-1]
    sh_ref[0:g, :] = xl_s.astype(sh_ref.dtype)
    sh_ref[g:2 * g, :] = xr_s.astype(sh_ref.dtype)
    if 2 * g < c:                 # remaining channels pass through unchanged
        sh_ref[2 * g:, :] = x_ref[2 * g:, :].astype(sh_ref.dtype)

    # ---- grouped 1x1 conv: one (C,C) x (C, N*T) MXU matmul -------------------
    # TODO(synk): when slide >= 128, switch to per-group (G, slide, slide) dots
    # (or a grid over G) to skip the zero off-diagonal blocks of the dense weight.
    conv = jnp.dot(w_ref[...], sh_ref[...],
                   preferred_element_type=jnp.float32)    # (C, N*T), f32 accum

    # ---- BatchNorm1d (training mode), single-pass stats over the lane axis ---
    inv_n = 1.0 / nt
    s1 = jnp.sum(conv, axis=1, keepdims=True)             # (C, 1)
    s2 = jnp.sum(conv * conv, axis=1, keepdims=True)      # (C, 1)
    mean = s1 * inv_n
    var = s2 * inv_n - mean * mean                        # biased batch variance
    scale = gamma_ref[...] * lax.rsqrt(var + eps)         # fold gamma * inv_std
    bias = beta_ref[...] - mean * scale
    o_ref[...] = conv * scale + bias                      # fused mul+add epilogue


def gtsconv(x, conv_weight, gamma, beta, *, n_groups, eps=1e-5,
            mxu_dtype=jnp.float32):
    """x: (N, C, T); conv_weight: (C, C//n_groups, 1) [PyTorch Conv1d layout];
    gamma/beta: (C,).  mxu_dtype=jnp.bfloat16 uses bf16 matmul operands
    (recommended on v6e/v7x); accumulation and all BN math stay in float32."""
    n, c, t = x.shape
    g = n_groups
    slide = c // g
    assert slide >= 2, "InplaceShift needs at least 2 channels per group"
    nt = n * t

    # --- channel permutation: [shift-left ch..., shift-right ch..., rest...] ---
    left = [i * slide for i in range(g)]
    right = [i * slide + 1 for i in range(g)]
    rest = [ch for ch in range(c) if ch % slide >= 2]
    perm = jnp.asarray(left + right + rest, dtype=jnp.int32)
    inv_perm = jnp.zeros((c,), jnp.int32).at[perm].set(
        jnp.arange(c, dtype=jnp.int32))

    # --- dense block-diagonal (C, C) weight from the grouped (C, slide, 1) one ---
    w2d = conv_weight[:, :, 0].astype(jnp.float32)        # (C, slide)
    w_full = jnp.zeros((c, c), jnp.float32)
    for gi in range(g):
        lo, hi = gi * slide, (gi + 1) * slide
        w_full = w_full.at[lo:hi, lo:hi].set(w2d[lo:hi, :])
    w_p = w_full[perm][:, perm].astype(mxu_dtype)         # permute rows + cols

    # --- lane-dense (C, N*T) input slab, permuted channel order ---------------
    x_p = jnp.transpose(x.astype(jnp.float32)[:, perm, :], (1, 0, 2)).reshape(c, nt)
    gamma_p = gamma.astype(jnp.float32)[perm].reshape(c, 1)
    beta_p = beta.astype(jnp.float32)[perm].reshape(c, 1)

    kernel = functools.partial(gtsconv_kernel, n_groups=g, t_len=t, eps=eps)
    vmem = pl.BlockSpec(memory_space=pltpu.MemorySpace.VMEM)
    itemsize = jnp.dtype(mxu_dtype).itemsize
    # size the scoped VMEM limit from the actual temporaries (default scoped
    # limits are far below physical VMEM, esp. on v5e); clamp at v7x's 64 MiB.
    vmem_bytes = int(min(max(6 * c * nt * 4 + c * nt * itemsize
                             + c * c * itemsize + (2 << 20), 8 << 20), 64 << 20))

    # TODO(synk): for shapes exceeding VMEM (esp. v7x's 64 MiB), add a grid over
    # N/T tiles with a two-pass BN (accumulate per-channel sum/sumsq, then a
    # second normalization pass) and dimension_semantics=("parallel", ...).
    out2d = pl.pallas_call(
        kernel,
        out_shape=jax.ShapeDtypeStruct((c, nt), jnp.float32),
        in_specs=[vmem, vmem, vmem, vmem],
        out_specs=vmem,
        scratch_shapes=[pltpu.VMEM((c, nt), mxu_dtype)],
        compiler_params=pltpu.CompilerParams(vmem_limit_bytes=vmem_bytes),
    )(x_p, w_p, gamma_p, beta_p)

    # lane-dense (C, N*T) -> (N, C, T) in the original channel order
    return jnp.transpose(out2d.reshape(c, n, t), (1, 0, 2))[:, inv_perm, :]


def ref_gtsconv(x, conv_weight, gamma, beta, *, n_groups, eps=1e-5):
    """Pure-JAX reference mirroring the PyTorch forward (two-pass BN stats)."""
    n, c, t = x.shape
    slide = c // n_groups
    left = jnp.arange(n_groups) * slide
    right = left + 1
    zero_col = jnp.zeros((n, c, 1), x.dtype)
    x_left = jnp.concatenate([x[:, :, 1:], zero_col], axis=2)
    x_right = jnp.concatenate([zero_col, x[:, :, :-1]], axis=2)
    shifted = x.at[:, left, :].set(x_left[:, left, :])
    shifted = shifted.at[:, right, :].set(x_right[:, right, :])
    xs = shifted.reshape(n, n_groups, slide, t)
    w = conv_weight[:, :, 0].reshape(n_groups, slide, slide)
    conv = jnp.einsum('goi,ngit->ngot', w, xs,
                      precision=lax.Precision.HIGHEST).reshape(n, c, t)
    mean = conv.mean(axis=(0, 2), keepdims=True)
    var = ((conv - mean) ** 2).mean(axis=(0, 2), keepdims=True)
    return (gamma.reshape(1, c, 1) * (conv - mean) * lax.rsqrt(var + eps)
            + beta.reshape(1, c, 1))


if __name__ == "__main__":
    # small but lane-friendly shapes: N*T = 128 (one full lane width)
    N, C, T, G = 4, 16, 32, 4
    key = jax.random.PRNGKey(0)
    kx, kw = jax.random.split(key)

    x = jax.random.normal(kx, (N, C, T), dtype=jnp.float32)
    # PyTorch Conv1d(groups=G) weight shape: (C_out=C, C_in_per_group=C//G, k=1)
    conv_weight = 0.1 * jax.random.normal(kw, (C, C // G, 1), dtype=jnp.float32)
    gamma = 1.0 + 0.1 * jnp.arange(C, dtype=jnp.float32) / C   # non-trivial affine
    beta = 0.01 * jnp.arange(C, dtype=jnp.float32)

    ref = ref_gtsconv(x, conv_weight, gamma, beta, n_groups=G)

    # f32 MXU path (exact check)
    out = jax.block_until_ready(gtsconv(x, conv_weight, gamma, beta, n_groups=G))
    assert out.shape == (N, C, T)
    assert jnp.allclose(out, ref, atol=1e-4, rtol=1e-4), "f32 kernel mismatch vs reference"

    # bf16-operand MXU path (v6e/v7x optimization), f32 accumulation — loose check
    out_bf16 = jax.block_until_ready(
        gtsconv(x, conv_weight, gamma, beta, n_groups=G, mxu_dtype=jnp.bfloat16))
    assert out_bf16.shape == (N, C, T)
    assert jnp.allclose(out_bf16, ref, atol=1e-1, rtol=1e-1), "bf16 kernel mismatch vs reference"

    print("KERNEL_OK")
</pallas_src>

<mosaic_0001>
module attributes {stable_mosaic.version = 11 : i64} {
  func.func @gtsconv_kernel(%arg0: memref<16x128xf32, #tpu.memory_space<vmem>>, %arg1: memref<16x16xf32, #tpu.memory_space<vmem>>, %arg2: memref<16x1xf32, #tpu.memory_space<vmem>>, %arg3: memref<16x1xf32, #tpu.memory_space<vmem>>, %arg4: memref<16x128xf32, #tpu.memory_space<vmem>>, %arg5: memref<16x128xf32, #tpu.memory_space<vmem>>) attributes {dimension_semantics = [], scalar_prefetch = 0 : i64, scratch_operands = 1 : i64, tpu.core_type = #tpu.core_type<tc>} {
    %0 = tpu.iota {dimensions = array<i32: 1>} : vector<1x128xi32>
    %c32_i32 = arith.constant 32 : i32
    %c0_i32 = arith.constant 0 : i32
    %1 = arith.cmpi eq, %c32_i32, %c0_i32 : i32
    %c1_i32 = arith.constant 1 : i32
    %2 = arith.select %1, %c1_i32, %c32_i32 : i32
    %3 = vector.broadcast %2 : i32 to vector<1x128xi32>
    %4 = arith.remsi %0, %3 : vector<1x128xi32>
    %c0_i32_0 = arith.constant 0 : i32
    %5 = vector.broadcast %c0_i32_0 : i32 to vector<1x128xi32>
    %6 = arith.cmpi ne, %4, %5 : vector<1x128xi32>
    %c0_i32_1 = arith.constant 0 : i32
    %7 = vector.broadcast %c0_i32_1 : i32 to vector<1x128xi32>
    %8 = arith.cmpi slt, %4, %7 : vector<1x128xi32>
    %c0_i32_2 = arith.constant 0 : i32
    %9 = arith.cmpi slt, %2, %c0_i32_2 : i32
    %10 = vector.broadcast %9 : i1 to vector<1x128xi1>
    %11 = vector.broadcast %10 : vector<1x128xi1> to vector<1x128xi1>
    %12 = arith.xori %8, %11 : vector<1x128xi1>
    %13 = arith.andi %12, %6 : vector<1x128xi1>
    %14 = vector.broadcast %2 : i32 to vector<1x128xi32>
    %15 = arith.addi %4, %14 : vector<1x128xi32>
    %16 = arith.select %13, %15, %4 : vector<1x128xi1>, vector<1x128xi32>
    %c0 = arith.constant 0 : index
    %c0_3 = arith.constant 0 : index
    %17 = vector.load %arg0[%c0, %c0_3] : memref<16x128xf32, #tpu.memory_space<vmem>>, vector<4x128xf32>
    %c4 = arith.constant 4 : index
    %c0_4 = arith.constant 0 : index
    %18 = vector.load %arg0[%c4, %c0_4] : memref<16x128xf32, #tpu.memory_space<vmem>>, vector<4x128xf32>
    %c31_i32 = arith.constant 31 : i32
    %19 = vector.broadcast %c31_i32 : i32 to vector<1x128xi32>
    %20 = arith.cmpi eq, %16, %19 : vector<1x128xi32>
    %c127_i32 = arith.constant 127 : i32
    %21 = tpu.dynamic_rotate %17 by %c127_i32 dim 1 : vector<4x128xf32>, i32 -> vector<4x128xf32>
    %cst = arith.constant 0.000000e+00 : f32
    %22 = vector.shape_cast %20 : vector<1x128xi1> to vector<1x128xi1>
    %23 = vector.broadcast %22 : vector<1x128xi1> to vector<4x128xi1>
    %24 = vector.broadcast %cst : f32 to vector<4x128xf32>
    %25 = arith.select %23, %24, %21 : vector<4x128xi1>, vector<4x128xf32>
    %c0_i32_5 = arith.constant 0 : i32
    %26 = vector.broadcast %c0_i32_5 : i32 to vector<1x128xi32>
    %27 = arith.cmpi eq, %16, %26 : vector<1x128xi32>
    %c1_i32_6 = arith.constant 1 : i32
    %28 = tpu.dynamic_rotate %18 by %c1_i32_6 dim 1 : vector<4x128xf32>, i32 -> vector<4x128xf32>
    %cst_7 = arith.constant 0.000000e+00 : f32
    %29 = vector.shape_cast %27 : vector<1x128xi1> to vector<1x128xi1>
    %30 = vector.broadcast %29 : vector<1x128xi1> to vector<4x128xi1>
    %31 = vector.broadcast %cst_7 : f32 to vector<4x128xf32>
    %32 = arith.select %30, %31, %28 : vector<4x128xi1>, vector<4x128xf32>
    %c0_8 = arith.constant 0 : index
    %c0_9 = arith.constant 0 : index
    %33 = vector.load %arg5[%c0_8, %c0_9] : memref<16x128xf32, #tpu.memory_space<vmem>>, vector<4x128xf32>
    tpu.vector_store %arg5[%c0_8, %c0_9], %25 {strides = array<i32>} : memref<16x128xf32, #tpu.memory_space<vmem>>, vector<4x128xf32>,
    %c4_10 = arith.constant 4 : index
    %c0_11 = arith.constant 0 : index
    %34 = vector.load %arg5[%c4_10, %c0_11] : memref<16x128xf32, #tpu.memory_space<vmem>>, vector<4x128xf32>
    tpu.vector_store %arg5[%c4_10, %c0_11], %32 {strides = array<i32>} : memref<16x128xf32, #tpu.memory_space<vmem>>, vector<4x128xf32>,
    %c8 = arith.constant 8 : index
    %c0_12 = arith.constant 0 : index
    %35 = vector.load %arg0[%c8, %c0_12] : memref<16x128xf32, #tpu.memory_space<vmem>>, vector<8x128xf32>
    %c8_13 = arith.constant 8 : index
    %c0_14 = arith.constant 0 : index
    %36 = vector.load %arg5[%c8_13, %c0_14] : memref<16x128xf32, #tpu.memory_space<vmem>>, vector<8x128xf32>
    tpu.vector_store %arg5[%c8_13, %c0_14], %35 {strides = array<i32>} : memref<16x128xf32, #tpu.memory_space<vmem>>, vector<8x128xf32>,
    %c0_15 = arith.constant 0 : index
    %c0_16 = arith.constant 0 : index
    %37 = vector.load %arg1[%c0_15, %c0_16] : memref<16x16xf32, #tpu.memory_space<vmem>>, vector<16x16xf32>
    %c0_17 = arith.constant 0 : index
    %c0_18 = arith.constant 0 : index
    %38 = vector.load %arg5[%c0_17, %c0_18] : memref<16x128xf32, #tpu.memory_space<vmem>>, vector<16x128xf32>
    %cst_19 = arith.constant dense<0.000000e+00> : vector<16x128xf32>
    %39 = tpu.matmul %37, %38, %cst_19 {dimension_numbers = #tpu.dot_dimension_numbers<[1], [0], [0], [1], [0, 0, 1, 1], [], []>} : vector<16x16xf32>, vector<16x128xf32>, vector<16x128xf32> -> vector<16x128xf32>
    %cst_20 = arith.constant dense<0.000000e+00> : vector<16xf32>
    %40 = vector.multi_reduction <add>, %39, %cst_20 [1] : vector<16x128xf32> to vector<16xf32>
    %41 = vector.shape_cast %40 : vector<16xf32> to vector<16x1xf32>
    %42 = arith.mulf %39, %39 : vector<16x128xf32>
    %cst_21 = arith.constant dense<0.000000e+00> : vector<16xf32>
    %43 = vector.multi_reduction <add>, %42, %cst_21 [1] : vector<16x128xf32> to vector<16xf32>
    %44 = vector.shape_cast %43 : vector<16xf32> to vector<16x1xf32>
    %cst_22 = arith.constant 7.812500e-03 : f32
    %45 = vector.broadcast %cst_22 : f32 to vector<16x1xf32>
    %46 = arith.mulf %41, %45 : vector<16x1xf32>
    %cst_23 = arith.constant 7.812500e-03 : f32
    %47 = vector.broadcast %cst_23 : f32 to vector<16x1xf32>
    %48 = arith.mulf %44, %47 : vector<16x1xf32>
    %49 = arith.mulf %46, %46 : vector<16x1xf32>
    %50 = arith.subf %48, %49 : vector<16x1xf32>
    %c0_24 = arith.constant 0 : index
    %c0_25 = arith.constant 0 : index
    %51 = vector.load %arg2[%c0_24, %c0_25] : memref<16x1xf32, #tpu.memory_space<vmem>>, vector<16x1xf32>
    %cst_26 = arith.constant 9.99999974E-6 : f32
    %52 = vector.broadcast %cst_26 : f32 to vector<16x1xf32>
    %53 = arith.addf %50, %52 : vector<16x1xf32>
    %54 = math.rsqrt %53 : vector<16x1xf32>
    %55 = arith.mulf %51, %54 : vector<16x1xf32>
    %c0_27 = arith.constant 0 : index
    %c0_28 = arith.constant 0 : index
    %56 = vector.load %arg3[%c0_27, %c0_28] : memref<16x1xf32, #tpu.memory_space<vmem>>, vector<16x1xf32>
    %57 = arith.mulf %46, %55 : vector<16x1xf32>
    %58 = arith.subf %56, %57 : vector<16x1xf32>
    %59 = vector.broadcast %55 : vector<16x1xf32> to vector<16x128xf32>
    %60 = arith.mulf %39, %59 : vector<16x128xf32>
    %61 = vector.broadcast %58 : vector<16x1xf32> to vector<16x128xf32>
    %62 = arith.addf %60, %61 : vector<16x128xf32>
    %c0_29 = arith.constant 0 : index
    %c0_30 = arith.constant 0 : index
    %63 = vector.load %arg4[%c0_29, %c0_30] : memref<16x128xf32, #tpu.memory_space<vmem>>, vector<16x128xf32>
    tpu.vector_store %arg4[%c0_29, %c0_30], %62 {strides = array<i32>} : memref<16x128xf32, #tpu.memory_space<vmem>>, vector<16x128xf32>,
    return
  }
}

</mosaic_0001>

<llo_original>
// kernel: tpu_custom_call.1
$region0: #{tpu_custom_call.1}
  #allocation0 [shape = 'u32[]', space=smem, size = 0x4, offset = 0x4, fixed_abs, tag = 'smem constant byte address 0x4 - core index']
  #allocation1 [shape = 'u32[72,128]{1,0:T(1,128)}', space=vmem, size = 0x9000, scoped, tag = 'internal scratch']
  #allocation2 [shape = 'f32[16,128]{1,0:T(8,128)}', space=vmem, size = 0x2000, scoped, tag = 'scratch operand']
  %s0 = inlined_call_operand.vmem [shape: f32[16,128], index: 0, kind: input, shape index: {}]
  %s1 = inlined_call_operand.vmem [shape: f32[16,16], index: 1, kind: input, shape index: {}]
  %s2 = inlined_call_operand.vmem [shape: f32[16,1], index: 2, kind: input, shape index: {}]
  %s3 = inlined_call_operand.vmem [shape: f32[16,1], index: 3, kind: input, shape index: {}]
  %s4 = inlined_call_operand.hbm [shape: f32[16,128], index: 4, kind: output, shape index: {}]
  %s5 = sld [smem:[#allocation0]]
  $region26: #{tpu_custom_call.1} parent=0
    _
  %s7 = ssub.s32 1, %s5
  %s8 = scalar_select 0, %s7, %s5
  $region1: #{tpu_custom_call.1} parent=0
    #allocation3 [shape = 'u8[8192]{0}', space=vmem, size = 0x2000, scoped, tag = 'output window, operand 0, single buffered']
    #allocation4 [shape = 's32[1]{0}', space=sflag, size = 0x4, scoped, tag = 'scoped memory for tpu_custom_call.1']
    %9 = vsyncpa [#allocation4], 0
    // Predicated region
    $region2: #{tpu_custom_call.1} parent=1 // pred_check
      _
    $region3: #{tpu_custom_call.1} parent=1 // pred_check_branch
      %11 = sbr.rel (0) target = $region5
    $region4: #{tpu_custom_call.1} parent=1 // pred_region
      _
    $region5: #{tpu_custom_call.1} parent=1 // pred_fallthru
      _
    // Predicated region
    $region6: #{tpu_custom_call.1} parent=1 // pred_check
      _
    $region7: #{tpu_custom_call.1} parent=1 // pred_check_branch
      %13 = sbr.rel (0) target = $region9
    $region8: #{tpu_custom_call.1} parent=1 // pred_region
      _
    $region9: #{tpu_custom_call.1} parent=1 // pred_fallthru
      _
    // Predicated region
    $region10: #{tpu_custom_call.1} parent=1 // pred_check
      _
    $region11: #{tpu_custom_call.1} parent=1 // pred_check_branch
      %15 = sbr.rel (0) target = $region13
    $region12: #{tpu_custom_call.1} parent=1 // pred_region
      _
    $region13: #{tpu_custom_call.1} parent=1 // pred_fallthru
      _
    // Predicated region
    $region14: #{tpu_custom_call.1} parent=1 // pred_check
      _
    $region15: #{tpu_custom_call.1} parent=1 // pred_check_branch
      %17 = sbr.rel (0) target = $region17
    $region16: #{tpu_custom_call.1} parent=1 // pred_region
      _
    $region17: #{tpu_custom_call.1} parent=1 // pred_fallthru
      _
    %v18 = vlaneseq
    %v19 = vand.u32 %v18, 127
    %vm20 = vcmp.lt.s32.totalorder %v19, 0
    %v21 = vsub.s32 0, %v19
    %v22 = vsel %vm20, %v21, %v19
    %v23 = vshrl.u32 %v22, 5
    %v24 = vand.u32 %v22, 31
    %v25 = vsub.s32 0, %v24
    %v26 = vsel %vm20, %v25, %v24
    %vm27 = vcmp.ne.s32.totalorder %v26, 0
    %vm28 = vcmp.lt.s32.totalorder %v26, 0
    %vm29 = vmand %vm28, %vm27
    %v30 = vadd.s32 %v26, 32
    %v31 = vsel %vm29, %v30, %v26
    %v32 = vld [vmem:[%s0] sm:$0xf]
    %v33 = vld [vmem:[%s0 + $0x4] sm:$0xf]
    %vm34 = vcmp.eq.s32.totalorder %v31, 31
    %35 = vrot.lane.b32.xlu0 %v32, 127
    %v36 = vpop.permute.xlu0 %35
    %v37 = vsel %vm34, 1, 0
    %vm38 = vcmp.eq.s32.totalorder %v37, 1
    %v39 = vsel %vm38, 0.0, %v36
    %vm40 = vcmp.eq.s32.totalorder %v31, 0
    %41 = vrot.lane.b32.xlu0 %v33, 1
    %v42 = vpop.permute.xlu0 %41
    %v43 = vsel %vm40, 1, 0
    %vm44 = vcmp.eq.s32.totalorder %v43, 1
    %v45 = vsel %vm44, 0.0, %v42
    %46 = vst [vmem:[#allocation2] sm:$0xf] %v39
    %47 = vst [vmem:[#allocation2 + $0x4] sm:$0xf] %v45
    %v48 = vld [vmem:[%s0 + $0x8] sm:$0xff]
    %49 = vst [vmem:[#allocation2 + $0x8] sm:$0xff] %v48
    %v50 = vld [vmem:[%s1] sm:$0xff]
    %v51 = vld [vmem:[%s1 + $0x8] sm:$0xff]
    %v52 = vld [vmem:[#allocation2] sm:$0xff]
    %v53 = vld [vmem:[#allocation2 + $0x8] sm:$0xff]
    %vm54 = vcmask 130048
    %v56 = vsel %vm54, %v50, 0
    %v59 = vsel %vm54, %v51, 0
    %61 = vmatpush.msra.mxu0 0.0
    %62 = vmatpush.msra.mxu0 0.0
    %63 = vmatpush.msra.mxu0 0.0
    %64 = vmatpush.msra.mxu0 0.0
    %65 = vmatpush.msra.mxu0 0.0
    %66 = vmatpush.msra.mxu0 0.0
    %67 = vmatpush.msra.mxu0 0.0
    %68 = vmatpush.msra.mxu0 0.0
    %69 = vmatpush.msra.mxu0 0.0
    %70 = vmatpush.msra.mxu0 0.0
    %71 = vmatpush.msra.mxu0 0.0
    %72 = vmatpush.msra.mxu0 0.0
    %73 = vmatpush.msra.mxu0 0.0
    %74 = vmatpush.msra.mxu0 0.0
    %75 = vmatpush.msra.mxu0 %v53
    %76 = vmatpush.msra.mxu0 %v52
    %77 = vmatmul.f32.gmra.mxu0 %v56
    %v78 = vpop.f32.mrf.mxu0
    %v79 = vadd.f32 0.0, %v78
    %80 = vmatmul.f32.gmra.mxu0 %v59
    %v81 = vpop.f32.mrf.mxu0
    %v82 = vadd.f32 0.0, %v81
    %83 = vdwg.mxu0
    %84 = vadd.xlane.f32.xlu0 %v79
    %v85 = vpop.xlane.xlu0 %84
    %86 = vadd.xlane.f32.xlu0 %v82
    %v87 = vpop.xlane.xlu0 %86
    %v88 = vmul.f32 %v79, %v79
    %v89 = vmul.f32 %v82, %v82
    %90 = vadd.xlane.f32.xlu0 %v88
    %v91 = vpop.xlane.xlu0 %90
    %92 = vadd.xlane.f32.xlu0 %v89
    %v93 = vpop.xlane.xlu0 %92
    %v94 = vmul.f32 %v85, 0.0078125
    %v95 = vmul.f32 %v87, 0.0078125
    %v96 = vmul.f32 %v91, 0.0078125
    %v97 = vmul.f32 %v93, 0.0078125
    %v98 = vmul.f32 %v94, %v94
    %v99 = vmul.f32 %v95, %v95
    %v100 = vsub.f32 %v96, %v98
    %v101 = vsub.f32 %v97, %v99
    %v102 = vld [vmem:[%s2] sm:$0xff]
    %v103 = vld [vmem:[%s2 + $0x8] sm:$0xff]
    %v104 = vadd.f32 %v100, 1e-05
    %v105 = vadd.f32 %v101, 1e-05
    %v106 = vrsqrt.pop %v104
    %v107 = vmul.f32 %v106, %v104
    %v108 = vmul.f32 %v107, %v106
    %v109 = vmul.f32 0.5, %v108
    %v110 = vsub.f32 1.5, %v109
    %v111 = vmul.f32 %v106, %v110
    %vm112 = vweird.f32 %v104
    %vm113 = vweird.f32 %v106
    %vm114 = vmor %vm112, %vm113
    %v115 = vsel %vm114, %v106, %v111
    %v116 = vrsqrt.pop %v105
    %v117 = vmul.f32 %v116, %v105
    %v118 = vmul.f32 %v117, %v116
    %v119 = vmul.f32 0.5, %v118
    %v120 = vsub.f32 1.5, %v119
    %v121 = vmul.f32 %v116, %v120
    %vm122 = vweird.f32 %v105
    %vm123 = vweird.f32 %v116
    %vm124 = vmor %vm122, %vm123
    %v125 = vsel %vm124, %v116, %v121
    %v126 = vmul.f32 %v102, %v115
    %v127 = vmul.f32 %v103, %v125
    %v128 = vld [vmem:[%s3] sm:$0xff]
    %v129 = vld [vmem:[%s3 + $0x8] sm:$0xff]
    %v130 = vmul.f32 %v94, %v126
    %v131 = vmul.f32 %v95, %v127
    %v132 = vsub.f32 %v128, %v130
    %v133 = vsub.f32 %v129, %v131
    %135 = vset.pattern.permute.xlu0 0
    %136 = vperm.xlu0 %135, %v126
    %v137 = vpop.permute.xlu0 %136
    %140 = vset.pattern.permute.xlu0 0
    %141 = vperm.xlu0 %140, %v127
    %v142 = vpop.permute.xlu0 %141
    %v144 = vmul.f32 %v79, %v137
    %v145 = vmul.f32 %v82, %v142
    %147 = vset.pattern.permute.xlu0 0
    %148 = vperm.xlu0 %147, %v132
    %v149 = vpop.permute.xlu0 %148
    %152 = vset.pattern.permute.xlu0 0
    %153 = vperm.xlu0 %152, %v133
    %v154 = vpop.permute.xlu0 %153
    %v156 = vadd.f32 %v144, %v149
    %v157 = vadd.f32 %v145, %v154
    %158 = vst [vmem:[#allocation3] sm:$0xff] %v156
    %159 = vst [vmem:[#allocation3 + $0x8] sm:$0xff] %v157
    // Predicated region
    $region18: #{tpu_custom_call.1} parent=1 // pred_check
      _
    $region19: #{tpu_custom_call.1} parent=1 // pred_check_branch
      %161 = sbr.rel (0) target = $region21
    $region20: #{tpu_custom_call.1} parent=1 // pred_region
      %163 = vsyncadd [#allocation4], 0
      %s164 = sshll.u32 [#allocation3], 4
      %s165 = int_to_ptr.vmem [resolvable:$true] %s164
      %s166 = sshll.u32 %s4, 4
      %s167 = int_to_ptr.hbm [resolvable:$true] %s166
      %172 = dma.vmem_to_hbm [thread:$0]  %s165, 256, %s167, [#allocation4], 128, 128, 8
    $region21: #{tpu_custom_call.1} parent=1 // pred_fallthru
      _
    // Predicated region
    $region22: #{tpu_custom_call.1} parent=1 // pred_check
      _
    $region23: #{tpu_custom_call.1} parent=1 // pred_check_branch
      %174 = sbr.rel (0) target = $region25
    $region24: #{tpu_custom_call.1} parent=1 // pred_region
      %176 = dma.done [#allocation4], 256
    $region25: #{tpu_custom_call.1} parent=1 // pred_fallthru
      _
    %177 = vsyncpa [#allocation4], 1

</llo_original>
